<compile_context>
chip_gen: v7x
topology: tpu7x:2x2x1
jax: 0.10.0
libtpu: 0.0.40
codegen_flags: <defaults>
</compile_context>

<pallas_src>
import functools

import jax
import jax.numpy as jnp
from jax import lax
from jax.experimental import pallas as pl
from jax.experimental.pallas import tpu as pltpu

LN_EPS = 1e-5                     # torch.nn.LayerNorm default
INV_SQRT2 = 0.7071067811865476    # 1/sqrt(2); avoids a per-element divide


def _round_up(x, m):
    return (x + m - 1) // m * m


def _masked_layernorm(x, gamma, beta, n_real):
    """Single-pass LayerNorm over the last axis.

    Statistics use only the first n_real lanes; gamma/beta are zero-padded
    past n_real, so padded lanes come out exactly 0.  var = E[x^2] - mu^2
    (clamped at 0) saves one full elementwise pass per tile vs two-pass.
    """
    n_pad = x.shape[-1]
    gamma = gamma.astype(jnp.float32)
    beta = beta.astype(jnp.float32)
    inv_n = 1.0 / float(n_real)
    if n_real == n_pad:
        xm = x
    else:
        lane = lax.broadcasted_iota(jnp.int32, x.shape, x.ndim - 1)
        xm = jnp.where(lane < n_real, x, 0.0)
    s1 = jnp.sum(xm, axis=-1, keepdims=True)
    s2 = jnp.sum(xm * xm, axis=-1, keepdims=True)
    mu = s1 * inv_n
    var = jnp.maximum(s2 * inv_n - mu * mu, 0.0)   # clamp cancellation error
    return (x - mu) * lax.rsqrt(var + LN_EPS) * gamma + beta


def block_kernel(x_ref,
                 g0_ref, b0_ref,      # outer LayerNorm (self.norm)
                 w1_ref, bb1_ref,     # Linear(in -> hidden), weight stored (C, H)
                 g1_ref, b1_ref,      # inner LayerNorm(hidden)
                 w2_ref, bb2_ref,     # Linear(hidden -> out), weight stored (H, C)
                 o_ref,
                 *, c_real, h_real, mm_dtype, approx_gelu):
    x = x_ref[...].astype(jnp.float32)

    # self.norm (LayerNorm over channel dim)
    y = _masked_layernorm(x, g0_ref[...], b0_ref[...], c_real)

    # Linear 1 on the MXU, f32 accumulation
    h = jnp.dot(y.astype(mm_dtype), w1_ref[...],
                preferred_element_type=jnp.float32)
    h = h + bb1_ref[...].astype(jnp.float32)

    # GELU: exact erf form matches torch.nn.GELU() default; tanh form goes
    # to the EUP slot (free vs. the saturating VALU) on the bf16 fast path.
    if approx_gelu:
        h = jax.nn.gelu(h, approximate=True)
    else:
        h = 0.5 * h * (1.0 + lax.erf(h * INV_SQRT2))

    # LayerNorm(hidden_dim)
    h = _masked_layernorm(h, g1_ref[...], b1_ref[...], h_real)

    # Linear 2 on the MXU, f32 accumulation
    out = jnp.dot(h.astype(mm_dtype), w2_ref[...],
                  preferred_element_type=jnp.float32)
    out = out + bb2_ref[...].astype(jnp.float32)

    # residual in f32, cast back on store (lane-dense Cp -> unmasked vst)
    o_ref[...] = (x + out).astype(o_ref.dtype)


def prepare_params(params, *, matmul_dtype=jnp.bfloat16):
    """Pad to lane-dense (multiple-of-128) dims and cast matmul operands once.

    Call this once per set of weights and reuse the result across forward
    calls; it removes a full HBM read+write of every weight per call.
    """
    mm = jnp.dtype(matmul_dtype) if matmul_dtype is not None else jnp.dtype(jnp.float32)
    C, H = params["w1"].shape
    Cp = _round_up(C, 128)
    Hp = _round_up(H, 128)

    def vec(v, n):
        v = jnp.asarray(v, jnp.float32)
        return jnp.pad(v, (0, n - v.shape[0])).reshape(1, n)

    def mat(w, r, c):
        w = jnp.asarray(w, mm)
        return jnp.pad(w, ((0, r - w.shape[0]), (0, c - w.shape[1])))

    return {
        "_prepared": True, "C": C, "H": H, "Cp": Cp, "Hp": Hp, "mm_dtype": mm,
        "g0": vec(params["g0"], Cp), "b0": vec(params["b0"], Cp),
        "w1": mat(params["w1"], Cp, Hp), "bb1": vec(params["bb1"], Hp),
        "g1": vec(params["g1"], Hp), "b1": vec(params["b1"], Hp),
        "w2": mat(params["w2"], Hp, Cp), "bb2": vec(params["bb2"], Cp),
    }


def _vmem_budget_bytes():
    """Usable scoped-VMEM budget for this chip generation, with headroom."""
    cap = 64 * 2**20   # conservative default: v7x per-TC VMEM
    try:
        cap = int(pltpu.get_tpu_info().vmem_capacity_bytes)
    except Exception:
        pass
    # Leave headroom for compiler-internal scratch / semaphores / output
    # pipeline: ~48 MiB usable on v7x, ~100 MiB on 128 MiB parts (v5e/v6e).
    return int(max(32 * 2**20, min(cap - 16 * 2**20, 100 * 2**20)))


def _vmem_estimate(rt, Cp, Hp, mm_itemsize, x_itemsize, weight_bufs):
    weights = weight_bufs * (Cp * Hp + Hp * Cp) * mm_itemsize
    vecs = weight_bufs * (3 * Cp + 3 * Hp) * 4
    io_tiles = 2 * 2 * rt * Cp * x_itemsize       # x-in + out, double-buffered
    temps = 4 * rt * (Cp + Hp) * 4                # f32 intermediates
    return weights + vecs + io_tiles + temps


def block_forward(x, params, *, row_tile=512, matmul_dtype=jnp.bfloat16,
                  approx_gelu=None):
    """x: (B, N, C) channels-last, C == in_channels == out_channels.

    `params` may be raw (from make_params) or pre-prepared via prepare_params.
    Output dtype follows x.dtype, so bf16 activations halve HBM traffic.
    """
    if not params.get("_prepared", False):
        params = prepare_params(params, matmul_dtype=matmul_dtype)
    mm_dtype = params["mm_dtype"]
    C, H, Cp, Hp = params["C"], params["H"], params["Cp"], params["Hp"]
    if approx_gelu is None:
        # fast path: tanh-GELU on the EUP when matmuls already run in bf16
        approx_gelu = (mm_dtype != jnp.dtype(jnp.float32))

    B, N, Cx = x.shape
    assert Cx == C, f"channel mismatch: x has {Cx}, params expect {C}"
    M = B * N
    M8 = _round_up(M, 8)
    x_itemsize = jnp.dtype(x.dtype).itemsize
    mm_itemsize = mm_dtype.itemsize

    budget = _vmem_budget_bytes()

    # Row (token) tiling: large tiles fill the MXU M dim and amortize the
    # ~0.35us/grid-step overhead; shrink only if VMEM does not fit.
    rt = _round_up(min(max(int(row_tile), 8), M8), 8)
    while rt > 64 and _vmem_estimate(rt, Cp, Hp, mm_itemsize, x_itemsize, 1) > 0.8 * budget:
        rt = _round_up(max(rt // 2, 8), 8)
    # TODO(synk): for very large C/H (Cp*Hp*itemsize approaching the VMEM
    # budget) add a second "arbitrary" grid axis tiling the hidden dim with an
    # f32 accumulator instead of keeping both full weights resident.

    # Prefer a tile that divides round_up(M, 8) so no row padding / output
    # slicing (extra HBM passes) is needed; otherwise fall back to padding.
    if M8 % rt != 0:
        div = None
        lo = max(8, rt - 64 * 8)
        for t in range(rt - (rt % 8), lo - 1, -8):
            if M8 % t == 0:
                div = t
                break
        if div is not None and div >= max(64, rt // 4):
            rt, Mp = div, M8
        else:
            Mp = _round_up(M8, rt)
    else:
        Mp = M8

    xf = x.reshape(M, C)
    if (Mp, Cp) != (M, C):
        xf = jnp.pad(xf, ((0, Mp - M), (0, Cp - C)))   # padded rows/lanes are discarded

    kernel = functools.partial(block_kernel, c_real=C, h_real=H,
                               mm_dtype=mm_dtype, approx_gelu=approx_gelu)

    args = (xf, params["g0"], params["b0"], params["w1"], params["bb1"],
            params["g1"], params["b1"], params["w2"], params["bb2"])

    def run(buffered_consts):
        if buffered_consts:
            # Constant-index blocks never change over the grid -> hold one copy.
            const = lambda s: pl.BlockSpec(s, lambda i: (0, 0),
                                           pipeline_mode=pl.Buffered(1))
            wbufs = 1
        else:
            const = lambda s: pl.BlockSpec(s, lambda i: (0, 0))
            wbufs = 2
        est = _vmem_estimate(rt, Cp, Hp, mm_itemsize, x_itemsize, wbufs)
        vmem_limit = int(min(budget, max(32 * 2**20, 2 * est)))
        return pl.pallas_call(
            kernel,
            out_shape=jax.ShapeDtypeStruct((Mp, Cp), x.dtype),
            grid=(Mp // rt,),
            in_specs=[
                pl.BlockSpec((rt, Cp), lambda i: (i, 0)),   # x tile
                const((1, Cp)), const((1, Cp)),             # outer LN
                const((Cp, Hp)), const((1, Hp)),            # Linear 1
                const((1, Hp)), const((1, Hp)),             # inner LN
                const((Hp, Cp)), const((1, Cp)),            # Linear 2
            ],
            out_specs=pl.BlockSpec((rt, Cp), lambda i: (i, 0)),
            compiler_params=pltpu.CompilerParams(
                dimension_semantics=("parallel",),
                vmem_limit_bytes=vmem_limit),
        )(*args)

    try:
        out = run(True)
        jax.block_until_ready(out)       # surface compile/run errors here
    except Exception:
        # Fallback if this jax build rejects Buffered(1) single-buffering.
        out = run(False)

    if (Mp, Cp) != (M, C):
        out = out[:M, :C]
    return out.reshape(B, N, C)


def make_params(key, in_channels, hidden_dim, out_channels):
    ks = jax.random.split(key, 4)
    scale1 = 1.0 / jnp.sqrt(in_channels)
    scale2 = 1.0 / jnp.sqrt(hidden_dim)
    return {
        # outer LayerNorm (applied first; in_ch == out_ch)
        "g0": jnp.ones((out_channels,), jnp.float32),
        "b0": jnp.zeros((out_channels,), jnp.float32),
        # Linear(in_channels, hidden_dim): stored as (in, hidden) = W.T
        "w1": jax.random.uniform(ks[0], (in_channels, hidden_dim),
                                 jnp.float32, -scale1, scale1),
        "bb1": jax.random.uniform(ks[1], (hidden_dim,),
                                  jnp.float32, -scale1, scale1),
        # LayerNorm(hidden_dim)
        "g1": jnp.ones((hidden_dim,), jnp.float32),
        "b1": jnp.zeros((hidden_dim,), jnp.float32),
        # Linear(hidden_dim, out_channels): stored as (hidden, out) = W.T
        "w2": jax.random.uniform(ks[2], (hidden_dim, out_channels),
                                 jnp.float32, -scale2, scale2),
        "bb2": jax.random.uniform(ks[3], (out_channels,),
                                  jnp.float32, -scale2, scale2),
    }


def block_reference(x, p, matmul_dtype=jnp.float32, approx_gelu=False):
    """Pure-JAX reference mirroring the PyTorch forward."""
    mm = jnp.dtype(matmul_dtype)

    def ln(v, g, b):
        mu = jnp.mean(v, axis=-1, keepdims=True)
        var = jnp.mean((v - mu) ** 2, axis=-1, keepdims=True)
        return (v - mu) * lax.rsqrt(var + LN_EPS) * g + b

    B, N, C = x.shape
    xf = x.reshape(B * N, C).astype(jnp.float32)
    y = ln(xf, p["g0"], p["b0"])
    h = jnp.dot(y.astype(mm), p["w1"].astype(mm),
                preferred_element_type=jnp.float32) + p["bb1"]
    if approx_gelu:
        h = jax.nn.gelu(h, approximate=True)
    else:
        h = 0.5 * h * (1.0 + lax.erf(h * INV_SQRT2))
    h = ln(h, p["g1"], p["b1"])
    out = jnp.dot(h.astype(mm), p["w2"].astype(mm),
                  preferred_element_type=jnp.float32) + p["bb2"]
    return (xf + out).astype(x.dtype).reshape(B, N, C)


if __name__ == "__main__":
    key = jax.random.PRNGKey(0)
    k_x, k_p, k_x2, k_p2 = jax.random.split(key, 4)

    # Case 1: small odd shapes (exercises lane padding + masked LN + tiny-M
    # tile clamping); exact f32 matmuls + erf GELU -> tight tolerance.
    B, N, C, H = 2, 8, 32, 64
    x = jax.random.normal(k_x, (B, N, C), jnp.float32)
    params = make_params(k_p, C, H, C)

    out = jax.block_until_ready(
        block_forward(x, params, matmul_dtype=jnp.float32, approx_gelu=False))
    ref = block_reference(x, params, matmul_dtype=jnp.float32, approx_gelu=False)
    assert out.shape == x.shape and out.dtype == x.dtype
    assert jnp.allclose(out, ref, atol=2e-4, rtol=2e-4), (
        float(jnp.max(jnp.abs(out - ref))))

    # Case 2: lane-dense multi-tile config with the DEFAULT fast path:
    # bf16 MXU operands (f32 accumulation), tanh-GELU on the EUP, weights
    # pre-padded/cast once and held single-buffered (Buffered(1)) in VMEM,
    # row_tile=512 chosen to divide M so no wrapper pad/slice happens.
    B2, N2, C2, H2 = 2, 512, 256, 512
    x2 = jax.random.normal(k_x2, (B2, N2, C2), jnp.float32)
    raw2 = make_params(k_p2, C2, H2, C2)
    prepped2 = prepare_params(raw2)          # hoisted out of the forward call

    out2 = jax.block_until_ready(block_forward(x2, prepped2, row_tile=512))
    ref2 = block_reference(x2, raw2, matmul_dtype=jnp.bfloat16, approx_gelu=True)
    ref2_exact = block_reference(x2, raw2)   # f32 matmuls, exact erf GELU
    assert out2.shape == x2.shape and out2.dtype == x2.dtype
    assert jnp.allclose(out2, ref2, atol=2e-2, rtol=2e-2), (
        float(jnp.max(jnp.abs(out2 - ref2))))
    assert float(jnp.max(jnp.abs(out2 - ref2_exact))) < 6e-2

    print("KERNEL_OK")
</pallas_src>

<mosaic_0001>
module attributes {stable_mosaic.version = 11 : i64} {
  func.func @block_kernel(%arg0: i32, %arg1: memref<16x128xf32, #tpu.memory_space<vmem>>, %arg2: memref<1x128xf32, #tpu.memory_space<vmem>>, %arg3: memref<1x128xf32, #tpu.memory_space<vmem>>, %arg4: memref<128x128xf32, #tpu.memory_space<vmem>>, %arg5: memref<1x128xf32, #tpu.memory_space<vmem>>, %arg6: memref<1x128xf32, #tpu.memory_space<vmem>>, %arg7: memref<1x128xf32, #tpu.memory_space<vmem>>, %arg8: memref<128x128xf32, #tpu.memory_space<vmem>>, %arg9: memref<1x128xf32, #tpu.memory_space<vmem>>, %arg10: memref<16x128xf32, #tpu.memory_space<vmem>>) attributes {dimension_semantics = [#tpu.dimension_semantics<parallel>], iteration_bounds = array<i64: 1>, scalar_prefetch = 0 : i64, scratch_operands = 0 : i64, tpu.core_type = #tpu.core_type<tc>, window_params = [{transform_indices = @transform_0, window_bounds = array<i64: 16, 128>}, {pipeline_mode = #tpu.pipeline_mode<synchronous>, transform_indices = @transform_1, window_bounds = array<i64: 1, 128>}, {pipeline_mode = #tpu.pipeline_mode<synchronous>, transform_indices = @transform_2, window_bounds = array<i64: 1, 128>}, {pipeline_mode = #tpu.pipeline_mode<synchronous>, transform_indices = @transform_3, window_bounds = array<i64: 128, 128>}, {pipeline_mode = #tpu.pipeline_mode<synchronous>, transform_indices = @transform_4, window_bounds = array<i64: 1, 128>}, {pipeline_mode = #tpu.pipeline_mode<synchronous>, transform_indices = @transform_5, window_bounds = array<i64: 1, 128>}, {pipeline_mode = #tpu.pipeline_mode<synchronous>, transform_indices = @transform_6, window_bounds = array<i64: 1, 128>}, {pipeline_mode = #tpu.pipeline_mode<synchronous>, transform_indices = @transform_7, window_bounds = array<i64: 128, 128>}, {pipeline_mode = #tpu.pipeline_mode<synchronous>, transform_indices = @transform_8, window_bounds = array<i64: 1, 128>}, {transform_indices = @transform_9, window_bounds = array<i64: 16, 128>}]} {
    %c0 = arith.constant 0 : index
    %c0_0 = arith.constant 0 : index
    %0 = vector.load %arg1[%c0, %c0_0] : memref<16x128xf32, #tpu.memory_space<vmem>>, vector<16x128xf32>
    %c0_1 = arith.constant 0 : index
    %c0_2 = arith.constant 0 : index
    %1 = vector.load %arg2[%c0_1, %c0_2] : memref<1x128xf32, #tpu.memory_space<vmem>>, vector<1x128xf32>
    %c0_3 = arith.constant 0 : index
    %c0_4 = arith.constant 0 : index
    %2 = vector.load %arg3[%c0_3, %c0_4] : memref<1x128xf32, #tpu.memory_space<vmem>>, vector<1x128xf32>
    %3 = tpu.iota {dimensions = array<i32: 1>} : vector<16x128xi32>
    %c32_i32 = arith.constant 32 : i32
    %4 = vector.broadcast %c32_i32 : i32 to vector<16x128xi32>
    %5 = arith.cmpi slt, %3, %4 : vector<16x128xi32>
    %cst = arith.constant 0.000000e+00 : f32
    %6 = vector.broadcast %cst : f32 to vector<16x128xf32>
    %7 = arith.select %5, %0, %6 : vector<16x128xi1>, vector<16x128xf32>
    %cst_5 = arith.constant dense<0.000000e+00> : vector<16xf32>
    %8 = vector.multi_reduction <add>, %7, %cst_5 [1] : vector<16x128xf32> to vector<16xf32>
    %9 = vector.shape_cast %8 : vector<16xf32> to vector<16x1xf32>
    %10 = arith.mulf %7, %7 : vector<16x128xf32>
    %cst_6 = arith.constant dense<0.000000e+00> : vector<16xf32>
    %11 = vector.multi_reduction <add>, %10, %cst_6 [1] : vector<16x128xf32> to vector<16xf32>
    %12 = vector.shape_cast %11 : vector<16xf32> to vector<16x1xf32>
    %cst_7 = arith.constant 3.125000e-02 : f32
    %13 = vector.broadcast %cst_7 : f32 to vector<16x1xf32>
    %14 = arith.mulf %9, %13 : vector<16x1xf32>
    %cst_8 = arith.constant 3.125000e-02 : f32
    %15 = vector.broadcast %cst_8 : f32 to vector<16x1xf32>
    %16 = arith.mulf %12, %15 : vector<16x1xf32>
    %17 = arith.mulf %14, %14 : vector<16x1xf32>
    %18 = arith.subf %16, %17 : vector<16x1xf32>
    %cst_9 = arith.constant 0.000000e+00 : f32
    %19 = vector.broadcast %cst_9 : f32 to vector<16x1xf32>
    %20 = arith.maximumf %18, %19 : vector<16x1xf32>
    %21 = vector.broadcast %14 : vector<16x1xf32> to vector<16x128xf32>
    %22 = arith.subf %0, %21 : vector<16x128xf32>
    %cst_10 = arith.constant 9.99999974E-6 : f32
    %23 = vector.broadcast %cst_10 : f32 to vector<16x1xf32>
    %24 = arith.addf %20, %23 : vector<16x1xf32>
    %25 = math.rsqrt %24 : vector<16x1xf32>
    %26 = vector.broadcast %25 : vector<16x1xf32> to vector<16x128xf32>
    %27 = arith.mulf %22, %26 : vector<16x128xf32>
    %28 = vector.broadcast %1 : vector<1x128xf32> to vector<16x128xf32>
    %29 = arith.mulf %27, %28 : vector<16x128xf32>
    %30 = vector.broadcast %2 : vector<1x128xf32> to vector<16x128xf32>
    %31 = arith.addf %29, %30 : vector<16x128xf32>
    %c0_11 = arith.constant 0 : index
    %c0_12 = arith.constant 0 : index
    %32 = vector.load %arg4[%c0_11, %c0_12] : memref<128x128xf32, #tpu.memory_space<vmem>>, vector<128x128xf32>
    %cst_13 = arith.constant dense<0.000000e+00> : vector<16x128xf32>
    %33 = tpu.matmul %31, %32, %cst_13 {dimension_numbers = #tpu.dot_dimension_numbers<[1], [0], [0], [1], [0, 0, 1, 1], [], []>} : vector<16x128xf32>, vector<128x128xf32>, vector<16x128xf32> -> vector<16x128xf32>
    %c0_14 = arith.constant 0 : index
    %c0_15 = arith.constant 0 : index
    %34 = vector.load %arg5[%c0_14, %c0_15] : memref<1x128xf32, #tpu.memory_space<vmem>>, vector<1x128xf32>
    %35 = vector.broadcast %34 : vector<1x128xf32> to vector<16x128xf32>
    %36 = arith.addf %33, %35 : vector<16x128xf32>
    %cst_16 = arith.constant 5.000000e-01 : f32
    %37 = vector.broadcast %cst_16 : f32 to vector<16x128xf32>
    %38 = arith.mulf %37, %36 : vector<16x128xf32>
    %cst_17 = arith.constant 0.707106769 : f32
    %39 = vector.broadcast %cst_17 : f32 to vector<16x128xf32>
    %40 = arith.mulf %36, %39 : vector<16x128xf32>
    %41 = math.erf %40 : vector<16x128xf32>
    %cst_18 = arith.constant 1.000000e+00 : f32
    %42 = vector.broadcast %cst_18 : f32 to vector<16x128xf32>
    %43 = arith.addf %42, %41 : vector<16x128xf32>
    %44 = arith.mulf %38, %43 : vector<16x128xf32>
    %c0_19 = arith.constant 0 : index
    %c0_20 = arith.constant 0 : index
    %45 = vector.load %arg6[%c0_19, %c0_20] : memref<1x128xf32, #tpu.memory_space<vmem>>, vector<1x128xf32>
    %c0_21 = arith.constant 0 : index
    %c0_22 = arith.constant 0 : index
    %46 = vector.load %arg7[%c0_21, %c0_22] : memref<1x128xf32, #tpu.memory_space<vmem>>, vector<1x128xf32>
    %47 = tpu.iota {dimensions = array<i32: 1>} : vector<16x128xi32>
    %c64_i32 = arith.constant 64 : i32
    %48 = vector.broadcast %c64_i32 : i32 to vector<16x128xi32>
    %49 = arith.cmpi slt, %47, %48 : vector<16x128xi32>
    %cst_23 = arith.constant 0.000000e+00 : f32
    %50 = vector.broadcast %cst_23 : f32 to vector<16x128xf32>
    %51 = arith.select %49, %44, %50 : vector<16x128xi1>, vector<16x128xf32>
    %cst_24 = arith.constant dense<0.000000e+00> : vector<16xf32>
    %52 = vector.multi_reduction <add>, %51, %cst_24 [1] : vector<16x128xf32> to vector<16xf32>
    %53 = vector.shape_cast %52 : vector<16xf32> to vector<16x1xf32>
    %54 = arith.mulf %51, %51 : vector<16x128xf32>
    %cst_25 = arith.constant dense<0.000000e+00> : vector<16xf32>
    %55 = vector.multi_reduction <add>, %54, %cst_25 [1] : vector<16x128xf32> to vector<16xf32>
    %56 = vector.shape_cast %55 : vector<16xf32> to vector<16x1xf32>
    %cst_26 = arith.constant 1.562500e-02 : f32
    %57 = vector.broadcast %cst_26 : f32 to vector<16x1xf32>
    %58 = arith.mulf %53, %57 : vector<16x1xf32>
    %cst_27 = arith.constant 1.562500e-02 : f32
    %59 = vector.broadcast %cst_27 : f32 to vector<16x1xf32>
    %60 = arith.mulf %56, %59 : vector<16x1xf32>
    %61 = arith.mulf %58, %58 : vector<16x1xf32>
    %62 = arith.subf %60, %61 : vector<16x1xf32>
    %cst_28 = arith.constant 0.000000e+00 : f32
    %63 = vector.broadcast %cst_28 : f32 to vector<16x1xf32>
    %64 = arith.maximumf %62, %63 : vector<16x1xf32>
    %65 = vector.broadcast %58 : vector<16x1xf32> to vector<16x128xf32>
    %66 = arith.subf %44, %65 : vector<16x128xf32>
    %cst_29 = arith.constant 9.99999974E-6 : f32
    %67 = vector.broadcast %cst_29 : f32 to vector<16x1xf32>
    %68 = arith.addf %64, %67 : vector<16x1xf32>
    %69 = math.rsqrt %68 : vector<16x1xf32>
    %70 = vector.broadcast %69 : vector<16x1xf32> to vector<16x128xf32>
    %71 = arith.mulf %66, %70 : vector<16x128xf32>
    %72 = vector.broadcast %45 : vector<1x128xf32> to vector<16x128xf32>
    %73 = arith.mulf %71, %72 : vector<16x128xf32>
    %74 = vector.broadcast %46 : vector<1x128xf32> to vector<16x128xf32>
    %75 = arith.addf %73, %74 : vector<16x128xf32>
    %c0_30 = arith.constant 0 : index
    %c0_31 = arith.constant 0 : index
    %76 = vector.load %arg8[%c0_30, %c0_31] : memref<128x128xf32, #tpu.memory_space<vmem>>, vector<128x128xf32>
    %cst_32 = arith.constant dense<0.000000e+00> : vector<16x128xf32>
    %77 = tpu.matmul %75, %76, %cst_32 {dimension_numbers = #tpu.dot_dimension_numbers<[1], [0], [0], [1], [0, 0, 1, 1], [], []>} : vector<16x128xf32>, vector<128x128xf32>, vector<16x128xf32> -> vector<16x128xf32>
    %c0_33 = arith.constant 0 : index
    %c0_34 = arith.constant 0 : index
    %78 = vector.load %arg9[%c0_33, %c0_34] : memref<1x128xf32, #tpu.memory_space<vmem>>, vector<1x128xf32>
    %79 = vector.broadcast %78 : vector<1x128xf32> to vector<16x128xf32>
    %80 = arith.addf %77, %79 : vector<16x128xf32>
    %81 = arith.addf %0, %80 : vector<16x128xf32>
    %c0_35 = arith.constant 0 : index
    %c0_36 = arith.constant 0 : index
    %82 = vector.load %arg10[%c0_35, %c0_36] : memref<16x128xf32, #tpu.memory_space<vmem>>, vector<16x128xf32>
    tpu.vector_store %arg10[%c0_35, %c0_36], %81 {strides = array<i32>} : memref<16x128xf32, #tpu.memory_space<vmem>>, vector<16x128xf32>,
    return
  }
  func.func @transform_0(%arg0: i32) -> (i32, i32) {
    %c0_i32 = arith.constant 0 : i32
    %c0_i32_0 = arith.constant 0 : i32
    return %arg0, %c0_i32 : i32, i32
  }
  func.func @transform_1(%arg0: i32) -> (i32, i32) {
    %c0_i32 = arith.constant 0 : i32
    %c0_i32_0 = arith.constant 0 : i32
    %c0_i32_1 = arith.constant 0 : i32
    return %c0_i32, %c0_i32_0 : i32, i32
  }
  func.func @transform_2(%arg0: i32) -> (i32, i32) {
    %c0_i32 = arith.constant 0 : i32
    %c0_i32_0 = arith.constant 0 : i32
    %c0_i32_1 = arith.constant 0 : i32
    return %c0_i32, %c0_i32_0 : i32, i32
  }
  func.func @transform_3(%arg0: i32) -> (i32, i32) {
    %c0_i32 = arith.constant 0 : i32
    %c0_i32_0 = arith.constant 0 : i32
    %c0_i32_1 = arith.constant 0 : i32
    return %c0_i32, %c0_i32_0 : i32, i32
  }
  func.func @transform_4(%arg0: i32) -> (i32, i32) {
    %c0_i32 = arith.constant 0 : i32
    %c0_i32_0 = arith.constant 0 : i32
    %c0_i32_1 = arith.constant 0 : i32
    return %c0_i32, %c0_i32_0 : i32, i32
  }
  func.func @transform_5(%arg0: i32) -> (i32, i32) {
    %c0_i32 = arith.constant 0 : i32
    %c0_i32_0 = arith.constant 0 : i32
    %c0_i32_1 = arith.constant 0 : i32
    return %c0_i32, %c0_i32_0 : i32, i32
  }
  func.func @transform_6(%arg0: i32) -> (i32, i32) {
    %c0_i32 = arith.constant 0 : i32
    %c0_i32_0 = arith.constant 0 : i32
    %c0_i32_1 = arith.constant 0 : i32
    return %c0_i32, %c0_i32_0 : i32, i32
  }
  func.func @transform_7(%arg0: i32) -> (i32, i32) {
    %c0_i32 = arith.constant 0 : i32
    %c0_i32_0 = arith.constant 0 : i32
    %c0_i32_1 = arith.constant 0 : i32
    return %c0_i32, %c0_i32_0 : i32, i32
  }
  func.func @transform_8(%arg0: i32) -> (i32, i32) {
    %c0_i32 = arith.constant 0 : i32
    %c0_i32_0 = arith.constant 0 : i32
    %c0_i32_1 = arith.constant 0 : i32
    return %c0_i32, %c0_i32_0 : i32, i32
  }
  func.func @transform_9(%arg0: i32) -> (i32, i32) {
    %c0_i32 = arith.constant 0 : i32
    %c0_i32_0 = arith.constant 0 : i32
    return %arg0, %c0_i32 : i32, i32
  }
}

module attributes {stable_mosaic.version = 11 : i64} {
  func.func @block_kernel(%arg0: i32, %arg1: memref<16x128xf32, #tpu.memory_space<vmem>>, %arg2: memref<1x128xf32, #tpu.memory_space<vmem>>, %arg3: memref<1x128xf32, #tpu.memory_space<vmem>>, %arg4: memref<128x128xf32, #tpu.memory_space<vmem>>, %arg5: memref<1x128xf32, #tpu.memory_space<vmem>>, %arg6: memref<1x128xf32, #tpu.memory_space<vmem>>, %arg7: memref<1x128xf32, #tpu.memory_space<vmem>>, %arg8: memref<128x128xf32, #tpu.memory_space<vmem>>, %arg9: memref<1x128xf32, #tpu.memory_space<vmem>>, %arg10: memref<16x128xf32, #tpu.memory_space<vmem>>) attributes {dimension_semantics = [#tpu.dimension_semantics<parallel>], iteration_bounds = array<i64: 1>, scalar_prefetch = 0 : i64, scratch_operands = 0 : i64, tpu.core_type = #tpu.core_type<tc>, window_params = [{transform_indices = @transform_0, window_bounds = array<i64: 16, 128>}, {pipeline_mode = #tpu.pipeline_mode<synchronous>, transform_indices = @transform_1, window_bounds = array<i64: 1, 128>}, {pipeline_mode = #tpu.pipeline_mode<synchronous>, transform_indices = @transform_2, window_bounds = array<i64: 1, 128>}, {pipeline_mode = #tpu.pipeline_mode<synchronous>, transform_indices = @transform_3, window_bounds = array<i64: 128, 128>}, {pipeline_mode = #tpu.pipeline_mode<synchronous>, transform_indices = @transform_4, window_bounds = array<i64: 1, 128>}, {pipeline_mode = #tpu.pipeline_mode<synchronous>, transform_indices = @transform_5, window_bounds = array<i64: 1, 128>}, {pipeline_mode = #tpu.pipeline_mode<synchronous>, transform_indices = @transform_6, window_bounds = array<i64: 1, 128>}, {pipeline_mode = #tpu.pipeline_mode<synchronous>, transform_indices = @transform_7, window_bounds = array<i64: 128, 128>}, {pipeline_mode = #tpu.pipeline_mode<synchronous>, transform_indices = @transform_8, window_bounds = array<i64: 1, 128>}, {transform_indices = @transform_9, window_bounds = array<i64: 16, 128>}]} {
    %c0 = arith.constant 0 : index
    %c0_0 = arith.constant 0 : index
    %0 = vector.load %arg1[%c0, %c0_0] : memref<16x128xf32, #tpu.memory_space<vmem>>, vector<16x128xf32>
    %c0_1 = arith.constant 0 : index
    %c0_2 = arith.constant 0 : index
    %1 = vector.load %arg2[%c0_1, %c0_2] : memref<1x128xf32, #tpu.memory_space<vmem>>, vector<1x128xf32>
    %c0_3 = arith.constant 0 : index
    %c0_4 = arith.constant 0 : index
    %2 = vector.load %arg3[%c0_3, %c0_4] : memref<1x128xf32, #tpu.memory_space<vmem>>, vector<1x128xf32>
    %3 = tpu.iota {dimensions = array<i32: 1>} : vector<16x128xi32>
    %c32_i32 = arith.constant 32 : i32
    %4 = vector.broadcast %c32_i32 : i32 to vector<16x128xi32>
    %5 = arith.cmpi slt, %3, %4 : vector<16x128xi32>
    %cst = arith.constant 0.000000e+00 : f32
    %6 = vector.broadcast %cst : f32 to vector<16x128xf32>
    %7 = arith.select %5, %0, %6 : vector<16x128xi1>, vector<16x128xf32>
    %cst_5 = arith.constant dense<0.000000e+00> : vector<16xf32>
    %8 = vector.multi_reduction <add>, %7, %cst_5 [1] : vector<16x128xf32> to vector<16xf32>
    %9 = vector.shape_cast %8 : vector<16xf32> to vector<16x1xf32>
    %10 = arith.mulf %7, %7 : vector<16x128xf32>
    %cst_6 = arith.constant dense<0.000000e+00> : vector<16xf32>
    %11 = vector.multi_reduction <add>, %10, %cst_6 [1] : vector<16x128xf32> to vector<16xf32>
    %12 = vector.shape_cast %11 : vector<16xf32> to vector<16x1xf32>
    %cst_7 = arith.constant 3.125000e-02 : f32
    %13 = vector.broadcast %cst_7 : f32 to vector<16x1xf32>
    %14 = arith.mulf %9, %13 : vector<16x1xf32>
    %cst_8 = arith.constant 3.125000e-02 : f32
    %15 = vector.broadcast %cst_8 : f32 to vector<16x1xf32>
    %16 = arith.mulf %12, %15 : vector<16x1xf32>
    %17 = arith.mulf %14, %14 : vector<16x1xf32>
    %18 = arith.subf %16, %17 : vector<16x1xf32>
    %cst_9 = arith.constant 0.000000e+00 : f32
    %19 = vector.broadcast %cst_9 : f32 to vector<16x1xf32>
    %20 = arith.maximumf %18, %19 : vector<16x1xf32>
    %21 = vector.broadcast %14 : vector<16x1xf32> to vector<16x128xf32>
    %22 = arith.subf %0, %21 : vector<16x128xf32>
    %cst_10 = arith.constant 9.99999974E-6 : f32
    %23 = vector.broadcast %cst_10 : f32 to vector<16x1xf32>
    %24 = arith.addf %20, %23 : vector<16x1xf32>
    %25 = math.rsqrt %24 : vector<16x1xf32>
    %26 = vector.broadcast %25 : vector<16x1xf32> to vector<16x128xf32>
    %27 = arith.mulf %22, %26 : vector<16x128xf32>
    %28 = vector.broadcast %1 : vector<1x128xf32> to vector<16x128xf32>
    %29 = arith.mulf %27, %28 : vector<16x128xf32>
    %30 = vector.broadcast %2 : vector<1x128xf32> to vector<16x128xf32>
    %31 = arith.addf %29, %30 : vector<16x128xf32>
    %c0_11 = arith.constant 0 : index
    %c0_12 = arith.constant 0 : index
    %32 = vector.load %arg4[%c0_11, %c0_12] : memref<128x128xf32, #tpu.memory_space<vmem>>, vector<128x128xf32>
    %cst_13 = arith.constant dense<0.000000e+00> : vector<16x128xf32>
    %33 = tpu.matmul %31, %32, %cst_13 {dimension_numbers = #tpu.dot_dimension_numbers<[1], [0], [0], [1], [0, 0, 1, 1], [], []>} : vector<16x128xf32>, vector<128x128xf32>, vector<16x128xf32> -> vector<16x128xf32>
    %c0_14 = arith.constant 0 : index
    %c0_15 = arith.constant 0 : index
    %34 = vector.load %arg5[%c0_14, %c0_15] : memref<1x128xf32, #tpu.memory_space<vmem>>, vector<1x128xf32>
    %35 = vector.broadcast %34 : vector<1x128xf32> to vector<16x128xf32>
    %36 = arith.addf %33, %35 : vector<16x128xf32>
    %cst_16 = arith.constant 5.000000e-01 : f32
    %37 = vector.broadcast %cst_16 : f32 to vector<16x128xf32>
    %38 = arith.mulf %37, %36 : vector<16x128xf32>
    %cst_17 = arith.constant 0.707106769 : f32
    %39 = vector.broadcast %cst_17 : f32 to vector<16x128xf32>
    %40 = arith.mulf %36, %39 : vector<16x128xf32>
    %41 = math.erf %40 : vector<16x128xf32>
    %cst_18 = arith.constant 1.000000e+00 : f32
    %42 = vector.broadcast %cst_18 : f32 to vector<16x128xf32>
    %43 = arith.addf %42, %41 : vector<16x128xf32>
    %44 = arith.mulf %38, %43 : vector<16x128xf32>
    %c0_19 = arith.constant 0 : index
    %c0_20 = arith.constant 0 : index
    %45 = vector.load %arg6[%c0_19, %c0_20] : memref<1x128xf32, #tpu.memory_space<vmem>>, vector<1x128xf32>
    %c0_21 = arith.constant 0 : index
    %c0_22 = arith.constant 0 : index
    %46 = vector.load %arg7[%c0_21, %c0_22] : memref<1x128xf32, #tpu.memory_space<vmem>>, vector<1x128xf32>
    %47 = tpu.iota {dimensions = array<i32: 1>} : vector<16x128xi32>
    %c64_i32 = arith.constant 64 : i32
    %48 = vector.broadcast %c64_i32 : i32 to vector<16x128xi32>
    %49 = arith.cmpi slt, %47, %48 : vector<16x128xi32>
    %cst_23 = arith.constant 0.000000e+00 : f32
    %50 = vector.broadcast %cst_23 : f32 to vector<16x128xf32>
    %51 = arith.select %49, %44, %50 : vector<16x128xi1>, vector<16x128xf32>
    %cst_24 = arith.constant dense<0.000000e+00> : vector<16xf32>
    %52 = vector.multi_reduction <add>, %51, %cst_24 [1] : vector<16x128xf32> to vector<16xf32>
    %53 = vector.shape_cast %52 : vector<16xf32> to vector<16x1xf32>
    %54 = arith.mulf %51, %51 : vector<16x128xf32>
    %cst_25 = arith.constant dense<0.000000e+00> : vector<16xf32>
    %55 = vector.multi_reduction <add>, %54, %cst_25 [1] : vector<16x128xf32> to vector<16xf32>
    %56 = vector.shape_cast %55 : vector<16xf32> to vector<16x1xf32>
    %cst_26 = arith.constant 1.562500e-02 : f32
    %57 = vector.broadcast %cst_26 : f32 to vector<16x1xf32>
    %58 = arith.mulf %53, %57 : vector<16x1xf32>
    %cst_27 = arith.constant 1.562500e-02 : f32
    %59 = vector.broadcast %cst_27 : f32 to vector<16x1xf32>
    %60 = arith.mulf %56, %59 : vector<16x1xf32>
    %61 = arith.mulf %58, %58 : vector<16x1xf32>
    %62 = arith.subf %60, %61 : vector<16x1xf32>
    %cst_28 = arith.constant 0.000000e+00 : f32
    %63 = vector.broadcast %cst_28 : f32 to vector<16x1xf32>
    %64 = arith.maximumf %62, %63 : vector<16x1xf32>
    %65 = vector.broadcast %58 : vector<16x1xf32> to vector<16x128xf32>
    %66 = arith.subf %44, %65 : vector<16x128xf32>
    %cst_29 = arith.constant 9.99999974E-6 : f32
    %67 = vector.broadcast %cst_29 : f32 to vector<16x1xf32>
    %68 = arith.addf %64, %67 : vector<16x1xf32>
    %69 = math.rsqrt %68 : vector<16x1xf32>
    %70 = vector.broadcast %69 : vector<16x1xf32> to vector<16x128xf32>
    %71 = arith.mulf %66, %70 : vector<16x128xf32>
    %72 = vector.broadcast %45 : vector<1x128xf32> to vector<16x128xf32>
    %73 = arith.mulf %71, %72 : vector<16x128xf32>
    %74 = vector.broadcast %46 : vector<1x128xf32> to vector<16x128xf32>
    %75 = arith.addf %73, %74 : vector<16x128xf32>
    %c0_30 = arith.constant 0 : index
    %c0_31 = arith.constant 0 : index
    %76 = vector.load %arg8[%c0_30, %c0_31] : memref<128x128xf32, #tpu.memory_space<vmem>>, vector<128x128xf32>
    %cst_32 = arith.constant dense<0.000000e+00> : vector<16x128xf32>
    %77 = tpu.matmul %75, %76, %cst_32 {dimension_numbers = #tpu.dot_dimension_numbers<[1], [0], [0], [1], [0, 0, 1, 1], [], []>} : vector<16x128xf32>, vector<128x128xf32>, vector<16x128xf32> -> vector<16x128xf32>
    %c0_33 = arith.constant 0 : index
    %c0_34 = arith.constant 0 : index
    %78 = vector.load %arg9[%c0_33, %c0_34] : memref<1x128xf32, #tpu.memory_space<vmem>>, vector<1x128xf32>
    %79 = vector.broadcast %78 : vector<1x128xf32> to vector<16x128xf32>
    %80 = arith.addf %77, %79 : vector<16x128xf32>
    %81 = arith.addf %0, %80 : vector<16x128xf32>
    %c0_35 = arith.constant 0 : index
    %c0_36 = arith.constant 0 : index
    %82 = vector.load %arg10[%c0_35, %c0_36] : memref<16x128xf32, #tpu.memory_space<vmem>>, vector<16x128xf32>
    tpu.vector_store %arg10[%c0_35, %c0_36], %81 {strides = array<i32>} : memref<16x128xf32, #tpu.memory_space<vmem>>, vector<16x128xf32>,
    return
  }
  func.func @transform_0(%arg0: i32) -> (i32, i32) {
    %c0_i32 = arith.constant 0 : i32
    %c0_i32_0 = arith.constant 0 : i32
    return %arg0, %c0_i32 : i32, i32
  }
  func.func @transform_1(%arg0: i32) -> (i32, i32) {
    %c0_i32 = arith.constant 0 : i32
    %c0_i32_0 = arith.constant 0 : i32
    %c0_i32_1 = arith.constant 0 : i32
    return %c0_i32, %c0_i32_0 : i32, i32
  }
  func.func @transform_2(%arg0: i32) -> (i32, i32) {
    %c0_i32 = arith.constant 0 : i32
    %c0_i32_0 = arith.constant 0 : i32
    %c0_i32_1 = arith.constant 0 : i32
    return %c0_i32, %c0_i32_0 : i32, i32
  }
  func.func @transform_3(%arg0: i32) -> (i32, i32) {
    %c0_i32 = arith.constant 0 : i32
    %c0_i32_0 = arith.constant 0 : i32
    %c0_i32_1 = arith.constant 0 : i32
    return %c0_i32, %c0_i32_0 : i32, i32
  }
  func.func @transform_4(%arg0: i32) -> (i32, i32) {
    %c0_i32 = arith.constant 0 : i32
    %c0_i32_0 = arith.constant 0 : i32
    %c0_i32_1 = arith.constant 0 : i32
    return %c0_i32, %c0_i32_0 : i32, i32
  }
  func.func @transform_5(%arg0: i32) -> (i32, i32) {
    %c0_i32 = arith.constant 0 : i32
    %c0_i32_0 = arith.constant 0 : i32
    %c0_i32_1 = arith.constant 0 : i32
    return %c0_i32, %c0_i32_0 : i32, i32
  }
  func.func @transform_6(%arg0: i32) -> (i32, i32) {
    %c0_i32 = arith.constant 0 : i32
    %c0_i32_0 = arith.constant 0 : i32
    %c0_i32_1 = arith.constant 0 : i32
    return %c0_i32, %c0_i32_0 : i32, i32
  }
  func.func @transform_7(%arg0: i32) -> (i32, i32) {
    %c0_i32 = arith.constant 0 : i32
    %c0_i32_0 = arith.constant 0 : i32
    %c0_i32_1 = arith.constant 0 : i32
    return %c0_i32, %c0_i32_0 : i32, i32
  }
  func.func @transform_8(%arg0: i32) -> (i32, i32) {
    %c0_i32 = arith.constant 0 : i32
    %c0_i32_0 = arith.constant 0 : i32
    %c0_i32_1 = arith.constant 0 : i32
    return %c0_i32, %c0_i32_0 : i32, i32
  }
  func.func @transform_9(%arg0: i32) -> (i32, i32) {
    %c0_i32 = arith.constant 0 : i32
    %c0_i32_0 = arith.constant 0 : i32
    return %arg0, %c0_i32 : i32, i32
  }
}

</mosaic_0001>

<llo_original>
// kernel: tpu_custom_call.1
$region0: #{tpu_custom_call.1}
  #allocation0 [shape = 'u32[]', space=smem, size = 0x4, offset = 0x4, fixed_abs, tag = 'smem constant byte address 0x4 - core index']
  #allocation1 [shape = 'u32[144,128]{1,0:T(1,128)}', space=vmem, size = 0x12000, scoped, tag = 'internal scratch']
  %s0 = inlined_call_operand.hbm [shape: f32[16,128], index: 0, kind: input, shape index: {}]
  %s1 = inlined_call_operand.vmem [shape: f32[1,128], index: 1, kind: input, shape index: {}]
  %s2 = inlined_call_operand.vmem [shape: f32[1,128], index: 2, kind: input, shape index: {}]
  %s3 = inlined_call_operand.hbm [shape: f32[128,128], index: 3, kind: input, shape index: {}]
  %s4 = inlined_call_operand.vmem [shape: f32[1,128], index: 4, kind: input, shape index: {}]
  %s5 = inlined_call_operand.vmem [shape: f32[1,128], index: 5, kind: input, shape index: {}]
  %s6 = inlined_call_operand.vmem [shape: f32[1,128], index: 6, kind: input, shape index: {}]
  %s7 = inlined_call_operand.hbm [shape: f32[128,128], index: 7, kind: input, shape index: {}]
  %s8 = inlined_call_operand.vmem [shape: f32[1,128], index: 8, kind: input, shape index: {}]
  %s9 = inlined_call_operand.hbm [shape: f32[16,128], index: 9, kind: output, shape index: {}]
  %s10 = sld [smem:[#allocation0]]
  $region58: #{tpu_custom_call.1} parent=0
    _
  %s12 = ssub.s32 1, %s10
  %s13 = scalar_select 0, %s12, %s10
  $region1: #{tpu_custom_call.1} parent=0
    #allocation2 [shape = 'u8[8192]{0}', space=vmem, size = 0x2000, scoped, tag = 'input window, operand 0, single buffered']
    #allocation3 [shape = 's32[1]{0}', space=sflag, size = 0x4, scoped, tag = 'scoped memory for tpu_custom_call.1']
    #allocation4 [shape = 's32[1]{0}', space=sflag, size = 0x4, scoped, tag = 'scoped memory for tpu_custom_call.1']
    #allocation5 [shape = 'u8[65536]{0}', space=vmem, size = 0x10000, scoped, tag = 'input window, operand 3, single buffered']
    #allocation6 [shape = 's32[1]{0}', space=sflag, size = 0x4, scoped, tag = 'scoped memory for tpu_custom_call.1']
    #allocation7 [shape = 'u8[65536]{0}', space=vmem, size = 0x10000, scoped, tag = 'input window, operand 7, single buffered']
    #allocation8 [shape = 'u8[8192]{0}', space=vmem, size = 0x2000, scoped, tag = 'output window, operand 0, single buffered']
    %14 = vsyncpa [#allocation3], 0
    %15 = vsyncpa [#allocation6], 0
    %16 = vsyncpa [#allocation4], 0
    // Predicated region
    $region2: #{tpu_custom_call.1} parent=1 // pred_check
      _
    $region3: #{tpu_custom_call.1} parent=1 // pred_check_branch
      %18 = sbr.rel (0) target = $region5
    $region4: #{tpu_custom_call.1} parent=1 // pred_region
      %s20 = ssub.s32 256, 256
      %21 = vsyncadd [#allocation3], %s20
      %s22 = sshll.u32 [#allocation2], 4
      %s23 = int_to_ptr.vmem [resolvable:$true] %s22
      %28 = dma.hbm_to_vmem [thread:$0]  %s0, 256, %s23, [#allocation3], 128, 128, 8
    $region5: #{tpu_custom_call.1} parent=1 // pred_fallthru
      _
    // Predicated region
    $region6: #{tpu_custom_call.1} parent=1 // pred_check
      _
    $region7: #{tpu_custom_call.1} parent=1 // pred_check_branch
      %30 = sbr.rel (0) target = $region9
    $region8: #{tpu_custom_call.1} parent=1 // pred_region
      _
    $region9: #{tpu_custom_call.1} parent=1 // pred_fallthru
      _
    // Predicated region
    $region10: #{tpu_custom_call.1} parent=1 // pred_check
      _
    $region11: #{tpu_custom_call.1} parent=1 // pred_check_branch
      %32 = sbr.rel (0) target = $region13
    $region12: #{tpu_custom_call.1} parent=1 // pred_region
      _
    $region13: #{tpu_custom_call.1} parent=1 // pred_fallthru
      _
    // Predicated region
    $region14: #{tpu_custom_call.1} parent=1 // pred_check
      _
    $region15: #{tpu_custom_call.1} parent=1 // pred_check_branch
      %34 = sbr.rel (0) target = $region17
    $region16: #{tpu_custom_call.1} parent=1 // pred_region
      %s36 = ssub.s32 2048, 2048
      %37 = vsyncadd [#allocation6], %s36
      %s38 = sshll.u32 [#allocation5], 4
      %s39 = int_to_ptr.vmem [resolvable:$true] %s38
      %44 = dma.hbm_to_vmem [thread:$0]  %s3, 2048, %s39, [#allocation6], 128, 128, 8
    $region17: #{tpu_custom_call.1} parent=1 // pred_fallthru
      _
    // Predicated region
    $region18: #{tpu_custom_call.1} parent=1 // pred_check
      _
    $region19: #{tpu_custom_call.1} parent=1 // pred_check_branch
      %46 = sbr.rel (0) target = $region21
    $region20: #{tpu_custom_call.1} parent=1 // pred_region
      _
    $region21: #{tpu_custom_call.1} parent=1 // pred_fallthru
      _
    // Predicated region
    $region22: #{tpu_custom_call.1} parent=1 // pred_check
      _
    $region23: #{tpu_custom_call.1} parent=1 // pred_check_branch
      %48 = sbr.rel (0) target = $region25
    $region24: #{tpu_custom_call.1} parent=1 // pred_region
      _
    $region25: #{tpu_custom_call.1} parent=1 // pred_fallthru
      _
    // Predicated region
    $region26: #{tpu_custom_call.1} parent=1 // pred_check
      _
    $region27: #{tpu_custom_call.1} parent=1 // pred_check_branch
      %50 = sbr.rel (0) target = $region29
    $region28: #{tpu_custom_call.1} parent=1 // pred_region
      _
    $region29: #{tpu_custom_call.1} parent=1 // pred_fallthru
      _
    // Predicated region
    $region30: #{tpu_custom_call.1} parent=1 // pred_check
      _
    $region31: #{tpu_custom_call.1} parent=1 // pred_check_branch
      %52 = sbr.rel (0) target = $region33
    $region32: #{tpu_custom_call.1} parent=1 // pred_region
      %s54 = ssub.s32 2048, 2048
      %55 = vsyncadd [#allocation6], %s54
      %s56 = sshll.u32 [#allocation7], 4
      %s57 = int_to_ptr.vmem [resolvable:$true] %s56
      %62 = dma.hbm_to_vmem [thread:$0]  %s7, 2048, %s57, [#allocation6], 128, 128, 8
    $region33: #{tpu_custom_call.1} parent=1 // pred_fallthru
      _
    // Predicated region
    $region34: #{tpu_custom_call.1} parent=1 // pred_check
      _
    $region35: #{tpu_custom_call.1} parent=1 // pred_check_branch
      %64 = sbr.rel (0) target = $region37
    $region36: #{tpu_custom_call.1} parent=1 // pred_region
      _
    $region37: #{tpu_custom_call.1} parent=1 // pred_fallthru
      _
    // Predicated region
    $region38: #{tpu_custom_call.1} parent=1 // pred_check
      _
    $region39: #{tpu_custom_call.1} parent=1 // pred_check_branch
      %66 = sbr.rel (0) target = $region41
    $region40: #{tpu_custom_call.1} parent=1 // pred_region
      %67 = dma.done [#allocation3], 256
    $region41: #{tpu_custom_call.1} parent=1 // pred_fallthru
      _
    // Predicated region
    $region42: #{tpu_custom_call.1} parent=1 // pred_check
      _
    $region43: #{tpu_custom_call.1} parent=1 // pred_check_branch
      %69 = sbr.rel (0) target = $region45
    $region44: #{tpu_custom_call.1} parent=1 // pred_region
      %70 = dma.done [#allocation6], 2048
    $region45: #{tpu_custom_call.1} parent=1 // pred_fallthru
      _
    // Predicated region
    $region46: #{tpu_custom_call.1} parent=1 // pred_check
      _
    $region47: #{tpu_custom_call.1} parent=1 // pred_check_branch
      %72 = sbr.rel (0) target = $region49
    $region48: #{tpu_custom_call.1} parent=1 // pred_region
      %73 = dma.done [#allocation6], 2048
    $region49: #{tpu_custom_call.1} parent=1 // pred_fallthru
      _
    %v74 = vld [vmem:[#allocation2] sm:$0xff]
    %v75 = vld [vmem:[#allocation2 + $0x8] sm:$0xff]
    %v76 = vld [vmem:[%s1] sm:$0x1]
    %v77 = vld [vmem:[%s2] sm:$0x1]
    %v78 = vlaneseq
    %v79 = vand.u32 %v78, 127
    %vm80 = vcmp.lt.s32.totalorder %v79, 32
    %v81 = vsel %vm80, %v74, 0.0
    %v82 = vsel %vm80, %v75, 0.0
    %83 = vadd.xlane.f32.xlu0 %v81
    %v84 = vpop.xlane.xlu0 %83
    %85 = vadd.xlane.f32.xlu0 %v82
    %v86 = vpop.xlane.xlu0 %85
    %v87 = vmul.f32 %v81, %v81
    %v88 = vmul.f32 %v82, %v82
    %89 = vadd.xlane.f32.xlu0 %v87
    %v90 = vpop.xlane.xlu0 %89
    %91 = vadd.xlane.f32.xlu0 %v88
    %v92 = vpop.xlane.xlu0 %91
    %v93 = vmul.f32 %v84, 0.03125
    %v94 = vmul.f32 %v86, 0.03125
    %v95 = vmul.f32 %v90, 0.03125
    %v96 = vmul.f32 %v92, 0.03125
    %v97 = vmul.f32 %v93, %v93
    %v98 = vmul.f32 %v94, %v94
    %v99 = vsub.f32 %v95, %v97
    %v100 = vsub.f32 %v96, %v98
    %v101 = vmax.f32 %v99, 0.0
    %v102 = vmax.f32 %v100, 0.0
    %v103 = vsub.f32 %v74, %v93
    %v104 = vsub.f32 %v75, %v94
    %v105 = vadd.f32 %v101, 1e-05
    %v106 = vadd.f32 %v102, 1e-05
    %v107 = vrsqrt.pop %v105
    %v108 = vrsqrt.pop %v106
    %v109 = vmul.f32 %v103, %v107
    %v110 = vmul.f32 %v104, %v108
    %v112 = vlaneseq
    %v113 = vshrl.u32 %v112, 7
    %v114 = vsub.s32 0, %v113
    %v115 = vrot.slane %v76, %v114
    %v117 = vmul.f32 %v109, %v115
    %v118 = vmul.f32 %v110, %v115
    %v120 = vlaneseq
    %v121 = vshrl.u32 %v120, 7
    %v122 = vsub.s32 0, %v121
    %v123 = vrot.slane %v77, %v122
    %v125 = vadd.f32 %v117, %v123
    %v126 = vadd.f32 %v118, %v123
    %v127 = vld [vmem:[#allocation5] sm:$0xff]
    %v128 = vld [vmem:[#allocation5 + $0x8] sm:$0xff]
    %v129 = vld [vmem:[#allocation5 + $0x10] sm:$0xff]
    %v130 = vld [vmem:[#allocation5 + $0x18] sm:$0xff]
    %v131 = vld [vmem:[#allocation5 + $0x20] sm:$0xff]
    %v132 = vld [vmem:[#allocation5 + $0x28] sm:$0xff]
    %v133 = vld [vmem:[#allocation5 + $0x30] sm:$0xff]
    %v134 = vld [vmem:[#allocation5 + $0x38] sm:$0xff]
    %v135 = vld [vmem:[#allocation5 + $0x40] sm:$0xff]
    %v136 = vld [vmem:[#allocation5 + $0x48] sm:$0xff]
    %v137 = vld [vmem:[#allocation5 + $0x50] sm:$0xff]
    %v138 = vld [vmem:[#allocation5 + $0x58] sm:$0xff]
    %v139 = vld [vmem:[#allocation5 + $0x60] sm:$0xff]
    %v140 = vld [vmem:[#allocation5 + $0x68] sm:$0xff]
    %v141 = vld [vmem:[#allocation5 + $0x70] sm:$0xff]
    %v142 = vld [vmem:[#allocation5 + $0x78] sm:$0xff]
    %v143 = vld [vmem:[%s4] sm:$0x1]
    %v145 = vlaneseq
    %v146 = vshrl.u32 %v145, 7
    %v147 = vsub.s32 0, %v146
    %v148 = vrot.slane %v143, %v147
    %150 = vmatprep.subr.mxu0 0.0
    %151 = vmatpush1.msra.mxu0 %v127
    %152 = vmatprep.subr.mxu0 0.0
    %153 = vmatpush1.msra.mxu0 %v128
    %154 = vmatprep.subr.mxu0 0.0
    %155 = vmatpush1.msra.mxu0 %v129
    %156 = vmatprep.subr.mxu0 0.0
    %157 = vmatpush1.msra.mxu0 %v130
    %158 = vmatprep.subr.mxu0 0.0
    %159 = vmatpush1.msra.mxu0 %v131
    %160 = vmatprep.subr.mxu0 0.0
    %161 = vmatpush1.msra.mxu0 %v132
    %162 = vmatprep.subr.mxu0 0.0
    %163 = vmatpush1.msra.mxu0 %v133
    %164 = vmatprep.subr.mxu0 0.0
    %165 = vmatpush1.msra.mxu0 %v134
    %166 = vmatprep.subr.mxu0 0.0
    %167 = vmatpush1.msra.mxu0 %v135
    %168 = vmatprep.subr.mxu0 0.0
    %169 = vmatpush1.msra.mxu0 %v136
    %170 = vmatprep.subr.mxu0 0.0
    %171 = vmatpush1.msra.mxu0 %v137
    %172 = vmatprep.subr.mxu0 0.0
    %173 = vmatpush1.msra.mxu0 %v138
    %174 = vmatprep.subr.mxu0 0.0
    %175 = vmatpush1.msra.mxu0 %v139
    %176 = vmatprep.subr.mxu0 0.0
    %177 = vmatpush1.msra.mxu0 %v140
    %178 = vmatprep.subr.mxu0 0.0
    %179 = vmatpush1.msra.mxu0 %v141
    %180 = vmatprep.subr.mxu0 0.0
    %181 = vmatpush1.msra.mxu0 %v142
    %182 = vmatprep.subr.mxu0 0.0
    %183 = vmatpush1.msra.mxu0 0.0
    %184 = vmatprep.subr.mxu0 0.0
    %185 = vmatpush1.msra.mxu0 0.0
    %186 = vmatprep.subr.mxu0 0.0
    %187 = vmatpush1.msra.mxu0 0.0
    %188 = vmatprep.subr.mxu0 0.0
    %189 = vmatpush1.msra.mxu0 0.0
    %190 = vmatprep.subr.mxu0 0.0
    %191 = vmatpush1.msra.mxu0 0.0
    %192 = vmatprep.subr.mxu0 0.0
    %193 = vmatpush1.msra.mxu0 0.0
    %194 = vmatprep.subr.mxu0 0.0
    %195 = vmatpush1.msra.mxu0 0.0
    %196 = vmatprep.subr.mxu0 0.0
    %197 = vmatpush1.msra.mxu0 0.0
    %198 = vmatprep.subr.mxu0 0.0
    %199 = vmatpush1.msra.mxu0 0.0
    %200 = vmatprep.subr.mxu0 0.0
    %201 = vmatpush1.msra.mxu0 0.0
    %202 = vmatprep.subr.mxu0 0.0
    %203 = vmatpush1.msra.mxu0 0.0
    %204 = vmatprep.subr.mxu0 0.0
    %205 = vmatpush1.msra.mxu0 0.0
    %206 = vmatprep.subr.mxu0 0.0
    %207 = vmatpush1.msra.mxu0 0.0
    %208 = vmatprep.subr.mxu0 0.0
    %209 = vmatpush1.msra.mxu0 0.0
    %210 = vmatprep.subr.mxu0 0.0
    %211 = vmatpush1.msra.mxu0 0.0
    %212 = vmatprep.subr.mxu0 0.0
    %213 = vmatpush1.msra.mxu0 0.0
    %214 = vmatprep.mubr.f32.mxu0 0.0
    %215 = vmatmul.mubr.f32.gmra.mrb[0].mxu0 %v125
    %v216 = vpop.f32.mrb[0].mxu0
    %v217 = vadd.f32 %v148, %v216
    %v218 = vpop.f32.mrb[0].mxu0
    %219 = vmatprep.mubr.f32.mxu0 0.0
    %220 = vmatmul.mubr.f32.gmra.mrb[0].mxu0 %v126
    %v221 = vpop.f32.mrb[0].mxu0
    %v222 = vadd.f32 %v148, %v221
    %v223 = vpop.f32.mrb[0].mxu0
    %224 = vdwg.mxu0
    %v225 = vmul.f32 %v217, 0.5
    %v226 = vmul.f32 %v222, 0.5
    %v227 = vmul.f32 %v217, 0.70710677
    %v228 = vmul.f32 %v222, 0.70710677
    %v229 = verf.f32.pop %v227
    %v230 = verf.f32.pop %v228
    %v231 = vadd.f32 %v229, 1.0
    %v232 = vadd.f32 %v230, 1.0
    %v233 = vmul.f32 %v225, %v231
    %v234 = vmul.f32 %v226, %v232
    %v235 = vld [vmem:[%s5] sm:$0x1]
    %v236 = vld [vmem:[%s6] sm:$0x1]
    %vm237 = vcmp.lt.s32.totalorder %v79, 64
    %v238 = vsel %vm237, %v233, 0.0
    %v239 = vsel %vm237, %v234, 0.0
    %240 = vadd.xlane.f32.xlu0 %v238
    %v241 = vpop.xlane.xlu0 %240
    %242 = vadd.xlane.f32.xlu0 %v239
    %v243 = vpop.xlane.xlu0 %242
    %v244 = vmul.f32 %v238, %v238
    %v245 = vmul.f32 %v239, %v239
    %246 = vadd.xlane.f32.xlu0 %v244
    %v247 = vpop.xlane.xlu0 %246
    %248 = vadd.xlane.f32.xlu0 %v245
    %v249 = vpop.xlane.xlu0 %248
    %v250 = vmul.f32 %v241, 0.015625
    %v251 = vmul.f32 %v243, 0.015625
    %v252 = vmul.f32 %v247, 0.015625
    %v253 = vmul.f32 %v249, 0.015625
    %v254 = vmul.f32 %v250, %v250
    %v255 = vmul.f32 %v251, %v251
    %v256 = vsub.f32 %v252, %v254
    %v257 = vsub.f32 %v253, %v255
    %v258 = vmax.f32 %v256, 0.0
    %v259 = vmax.f32 %v257, 0.0
    %v260 = vsub.f32 %v233, %v250
    %v261 = vsub.f32 %v234, %v251
    %v262 = vadd.f32 %v258, 1e-05
    %v263 = vadd.f32 %v259, 1e-05
    %v264 = vrsqrt.pop %v262
    %v265 = vrsqrt.pop %v263
    %v266 = vmul.f32 %v260, %v264
    %v267 = vmul.f32 %v261, %v265
    %v269 = vlaneseq
    %v270 = vshrl.u32 %v269, 7
    %v271 = vsub.s32 0, %v270
    %v272 = vrot.slane %v235, %v271
    %v274 = vmul.f32 %v266, %v272
    %v275 = vmul.f32 %v267, %v272
    %v277 = vlaneseq
    %v278 = vshrl.u32 %v277, 7
    %v279 = vsub.s32 0, %v278
    %v280 = vrot.slane %v236, %v279
    %v282 = vadd.f32 %v274, %v280
    %v283 = vadd.f32 %v275, %v280
    %v284 = vld [vmem:[#allocation7] sm:$0xff]
    %v285 = vld [vmem:[#allocation7 + $0x8] sm:$0xff]
    %v286 = vld [vmem:[#allocation7 + $0x10] sm:$0xff]
    %v287 = vld [vmem:[#allocation7 + $0x18] sm:$0xff]
    %v288 = vld [vmem:[#allocation7 + $0x20] sm:$0xff]
    %v289 = vld [vmem:[#allocation7 + $0x28] sm:$0xff]
    %v290 = vld [vmem:[#allocation7 + $0x30] sm:$0xff]
    %v291 = vld [vmem:[#allocation7 + $0x38] sm:$0xff]
    %v292 = vld [vmem:[#allocation7 + $0x40] sm:$0xff]
    %v293 = vld [vmem:[#allocation7 + $0x48] sm:$0xff]
    %v294 = vld [vmem:[#allocation7 + $0x50] sm:$0xff]
    %v295 = vld [vmem:[#allocation7 + $0x58] sm:$0xff]
    %v296 = vld [vmem:[#allocation7 + $0x60] sm:$0xff]
    %v297 = vld [vmem:[#allocation7 + $0x68] sm:$0xff]
    %v298 = vld [vmem:[#allocation7 + $0x70] sm:$0xff]
    %v299 = vld [vmem:[#allocation7 + $0x78] sm:$0xff]
    %v300 = vld [vmem:[%s8] sm:$0x1]
    %v302 = vlaneseq
    %v303 = vshrl.u32 %v302, 7
    %v304 = vsub.s32 0, %v303
    %v305 = vrot.slane %v300, %v304
    %307 = vmatprep.subr.mxu0 0.0
    %308 = vmatpush1.msra.mxu0 %v284
    %309 = vmatprep.subr.mxu0 0.0
    %310 = vmatpush1.msra.mxu0 %v285
    %311 = vmatprep.subr.mxu0 0.0
    %312 = vmatpush1.msra.mxu0 %v286
    %313 = vmatprep.subr.mxu0 0.0
    %314 = vmatpush1.msra.mxu0 %v287
    %315 = vmatprep.subr.mxu0 0.0
    %316 = vmatpush1.msra.mxu0 %v288
    %317 = vmatprep.subr.mxu0 0.0
    %318 = vmatpush1.msra.mxu0 %v289
    %319 = vmatprep.subr.mxu0 0.0
    %320 = vmatpush1.msra.mxu0 %v290
    %321 = vmatprep.subr.mxu0 0.0
    %322 = vmatpush1.msra.mxu0 %v291
    %323 = vmatprep.subr.mxu0 0.0
    %324 = vmatpush1.msra.mxu0 %v292
    %325 = vmatprep.subr.mxu0 0.0
    %326 = vmatpush1.msra.mxu0 %v293
    %327 = vmatprep.subr.mxu0 0.0
    %328 = vmatpush1.msra.mxu0 %v294
    %329 = vmatprep.subr.mxu0 0.0
    %330 = vmatpush1.msra.mxu0 %v295
    %331 = vmatprep.subr.mxu0 0.0
    %332 = vmatpush1.msra.mxu0 %v296
    %333 = vmatprep.subr.mxu0 0.0
    %334 = vmatpush1.msra.mxu0 %v297
    %335 = vmatprep.subr.mxu0 0.0
    %336 = vmatpush1.msra.mxu0 %v298
    %337 = vmatprep.subr.mxu0 0.0
    %338 = vmatpush1.msra.mxu0 %v299
    %339 = vmatprep.subr.mxu0 0.0
    %340 = vmatpush1.msra.mxu0 0.0
    %341 = vmatprep.subr.mxu0 0.0
    %342 = vmatpush1.msra.mxu0 0.0
    %343 = vmatprep.subr.mxu0 0.0
    %344 = vmatpush1.msra.mxu0 0.0
    %345 = vmatprep.subr.mxu0 0.0
    %346 = vmatpush1.msra.mxu0 0.0
    %347 = vmatprep.subr.mxu0 0.0
    %348 = vmatpush1.msra.mxu0 0.0
    %349 = vmatprep.subr.mxu0 0.0
    %350 = vmatpush1.msra.mxu0 0.0
    %351 = vmatprep.subr.mxu0 0.0
    %352 = vmatpush1.msra.mxu0 0.0
    %353 = vmatprep.subr.mxu0 0.0
    %354 = vmatpush1.msra.mxu0 0.0
    %355 = vmatprep.subr.mxu0 0.0
    %356 = vmatpush1.msra.mxu0 0.0
    %357 = vmatprep.subr.mxu0 0.0
    %358 = vmatpush1.msra.mxu0 0.0
    %359 = vmatprep.subr.mxu0 0.0
    %360 = vmatpush1.msra.mxu0 0.0
    %361 = vmatprep.subr.mxu0 0.0
    %362 = vmatpush1.msra.mxu0 0.0
    %363 = vmatprep.subr.mxu0 0.0
    %364 = vmatpush1.msra.mxu0 0.0
    %365 = vmatprep.subr.mxu0 0.0
    %366 = vmatpush1.msra.mxu0 0.0
    %367 = vmatprep.subr.mxu0 0.0
    %368 = vmatpush1.msra.mxu0 0.0
    %369 = vmatprep.subr.mxu0 0.0
    %370 = vmatpush1.msra.mxu0 0.0
    %371 = vmatprep.mubr.f32.mxu0 0.0
    %372 = vmatmul.mubr.f32.gmra.mrb[0].mxu0 %v282
    %v373 = vpop.f32.mrb[0].mxu0
    %v374 = vadd.f32 %v305, %v373
    %v375 = vpop.f32.mrb[0].mxu0
    %376 = vmatprep.mubr.f32.mxu0 0.0
    %377 = vmatmul.mubr.f32.gmra.mrb[0].mxu0 %v283
    %v378 = vpop.f32.mrb[0].mxu0
    %v379 = vadd.f32 %v305, %v378
    %v380 = vpop.f32.mrb[0].mxu0
    %381 = vdwg.mxu0
    %v382 = vadd.f32 %v74, %v374
    %v383 = vadd.f32 %v75, %v379
    %384 = vst [vmem:[#allocation8] sm:$0xff] %v382
    %385 = vst [vmem:[#allocation8 + $0x8] sm:$0xff] %v383
    // Predicated region
    $region50: #{tpu_custom_call.1} parent=1 // pred_check
      _
    $region51: #{tpu_custom_call.1} parent=1 // pred_check_branch
      %387 = sbr.rel (0) target = $region53
    $region52: #{tpu_custom_call.1} parent=1 // pred_region
      %s389 = ssub.s32 256, 256
      %390 = vsyncadd [#allocation4], %s389
      %s391 = sshll.u32 [#allocation8], 4
      %s392 = int_to_ptr.vmem [resolvable:$true] %s391
      %397 = dma.vmem_to_hbm [thread:$0]  %s392, 256, %s9, [#allocation4], 128, 128, 8
    $region53: #{tpu_custom_call.1} parent=1 // pred_fallthru
      _
    // Predicated region
    $region54: #{tpu_custom_call.1} parent=1 // pred_check
      _
    $region55: #{tpu_custom_call.1} parent=1 // pred_check_branch
      %399 = sbr.rel (0) target = $region57
    $region56: #{tpu_custom_call.1} parent=1 // pred_region
      %400 = dma.done [#allocation4], 256
    $region57: #{tpu_custom_call.1} parent=1 // pred_fallthru
      _
    %401 = vsyncpa [#allocation3], 1
    %402 = vsyncpa [#allocation6], 1
    %403 = vsyncpa [#allocation4], 1

// kernel: tpu_custom_call.1
$region0: #{tpu_custom_call.1}
  #allocation0 [shape = 'u32[]', space=smem, size = 0x4, offset = 0x4, fixed_abs, tag = 'smem constant byte address 0x4 - core index']
  #allocation1 [shape = 'u32[144,128]{1,0:T(1,128)}', space=vmem, size = 0x12000, scoped, tag = 'internal scratch']
  %s0 = inlined_call_operand.hbm [shape: f32[16,128], index: 0, kind: input, shape index: {}]
  %s1 = inlined_call_operand.vmem [shape: f32[1,128], index: 1, kind: input, shape index: {}]
  %s2 = inlined_call_operand.vmem [shape: f32[1,128], index: 2, kind: input, shape index: {}]
  %s3 = inlined_call_operand.hbm [shape: f32[128,128], index: 3, kind: input, shape index: {}]
  %s4 = inlined_call_operand.vmem [shape: f32[1,128], index: 4, kind: input, shape index: {}]
  %s5 = inlined_call_operand.vmem [shape: f32[1,128], index: 5, kind: input, shape index: {}]
  %s6 = inlined_call_operand.vmem [shape: f32[1,128], index: 6, kind: input, shape index: {}]
  %s7 = inlined_call_operand.hbm [shape: f32[128,128], index: 7, kind: input, shape index: {}]
  %s8 = inlined_call_operand.vmem [shape: f32[1,128], index: 8, kind: input, shape index: {}]
  %s9 = inlined_call_operand.hbm [shape: f32[16,128], index: 9, kind: output, shape index: {}]
  %s10 = sld [smem:[#allocation0]]
  $region58: #{tpu_custom_call.1} parent=0
    _
  %s12 = ssub.s32 1, %s10
  %s13 = scalar_select 0, %s12, %s10
  $region1: #{tpu_custom_call.1} parent=0
    #allocation2 [shape = 'u8[8192]{0}', space=vmem, size = 0x2000, scoped, tag = 'input window, operand 0, single buffered']
    #allocation3 [shape = 's32[1]{0}', space=sflag, size = 0x4, scoped, tag = 'scoped memory for tpu_custom_call.1']
    #allocation4 [shape = 's32[1]{0}', space=sflag, size = 0x4, scoped, tag = 'scoped memory for tpu_custom_call.1']
    #allocation5 [shape = 'u8[65536]{0}', space=vmem, size = 0x10000, scoped, tag = 'input window, operand 3, single buffered']
    #allocation6 [shape = 's32[1]{0}', space=sflag, size = 0x4, scoped, tag = 'scoped memory for tpu_custom_call.1']
    #allocation7 [shape = 'u8[65536]{0}', space=vmem, size = 0x10000, scoped, tag = 'input window, operand 7, single buffered']
    #allocation8 [shape = 'u8[8192]{0}', space=vmem, size = 0x2000, scoped, tag = 'output window, operand 0, single buffered']
    %14 = vsyncpa [#allocation3], 0
    %15 = vsyncpa [#allocation6], 0
    %16 = vsyncpa [#allocation4], 0
    // Predicated region
    $region2: #{tpu_custom_call.1} parent=1 // pred_check
      _
    $region3: #{tpu_custom_call.1} parent=1 // pred_check_branch
      %18 = sbr.rel (0) target = $region5
    $region4: #{tpu_custom_call.1} parent=1 // pred_region
      %s20 = ssub.s32 256, 256
      %21 = vsyncadd [#allocation3], %s20
      %s22 = sshll.u32 [#allocation2], 4
      %s23 = int_to_ptr.vmem [resolvable:$true] %s22
      %28 = dma.hbm_to_vmem [thread:$0]  %s0, 256, %s23, [#allocation3], 128, 128, 8
    $region5: #{tpu_custom_call.1} parent=1 // pred_fallthru
      _
    // Predicated region
    $region6: #{tpu_custom_call.1} parent=1 // pred_check
      _
    $region7: #{tpu_custom_call.1} parent=1 // pred_check_branch
      %30 = sbr.rel (0) target = $region9
    $region8: #{tpu_custom_call.1} parent=1 // pred_region
      _
    $region9: #{tpu_custom_call.1} parent=1 // pred_fallthru
      _
    // Predicated region
    $region10: #{tpu_custom_call.1} parent=1 // pred_check
      _
    $region11: #{tpu_custom_call.1} parent=1 // pred_check_branch
      %32 = sbr.rel (0) target = $region13
    $region12: #{tpu_custom_call.1} parent=1 // pred_region
      _
    $region13: #{tpu_custom_call.1} parent=1 // pred_fallthru
      _
    // Predicated region
    $region14: #{tpu_custom_call.1} parent=1 // pred_check
      _
    $region15: #{tpu_custom_call.1} parent=1 // pred_check_branch
      %34 = sbr.rel (0) target = $region17
    $region16: #{tpu_custom_call.1} parent=1 // pred_region
      %s36 = ssub.s32 2048, 2048
      %37 = vsyncadd [#allocation6], %s36
      %s38 = sshll.u32 [#allocation5], 4
      %s39 = int_to_ptr.vmem [resolvable:$true] %s38
      %44 = dma.hbm_to_vmem [thread:$0]  %s3, 2048, %s39, [#allocation6], 128, 128, 8
    $region17: #{tpu_custom_call.1} parent=1 // pred_fallthru
      _
    // Predicated region
    $region18: #{tpu_custom_call.1} parent=1 // pred_check
      _
    $region19: #{tpu_custom_call.1} parent=1 // pred_check_branch
      %46 = sbr.rel (0) target = $region21
    $region20: #{tpu_custom_call.1} parent=1 // pred_region
      _
    $region21: #{tpu_custom_call.1} parent=1 // pred_fallthru
      _
    // Predicated region
    $region22: #{tpu_custom_call.1} parent=1 // pred_check
      _
    $region23: #{tpu_custom_call.1} parent=1 // pred_check_branch
      %48 = sbr.rel (0) target = $region25
    $region24: #{tpu_custom_call.1} parent=1 // pred_region
      _
    $region25: #{tpu_custom_call.1} parent=1 // pred_fallthru
      _
    // Predicated region
    $region26: #{tpu_custom_call.1} parent=1 // pred_check
      _
    $region27: #{tpu_custom_call.1} parent=1 // pred_check_branch
      %50 = sbr.rel (0) target = $region29
    $region28: #{tpu_custom_call.1} parent=1 // pred_region
      _
    $region29: #{tpu_custom_call.1} parent=1 // pred_fallthru
      _
    // Predicated region
    $region30: #{tpu_custom_call.1} parent=1 // pred_check
      _
    $region31: #{tpu_custom_call.1} parent=1 // pred_check_branch
      %52 = sbr.rel (0) target = $region33
    $region32: #{tpu_custom_call.1} parent=1 // pred_region
      %s54 = ssub.s32 2048, 2048
      %55 = vsyncadd [#allocation6], %s54
      %s56 = sshll.u32 [#allocation7], 4
      %s57 = int_to_ptr.vmem [resolvable:$true] %s56
      %62 = dma.hbm_to_vmem [thread:$0]  %s7, 2048, %s57, [#allocation6], 128, 128, 8
    $region33: #{tpu_custom_call.1} parent=1 // pred_fallthru
      _
    // Predicated region
    $region34: #{tpu_custom_call.1} parent=1 // pred_check
      _
    $region35: #{tpu_custom_call.1} parent=1 // pred_check_branch
      %64 = sbr.rel (0) target = $region37
    $region36: #{tpu_custom_call.1} parent=1 // pred_region
      _
    $region37: #{tpu_custom_call.1} parent=1 // pred_fallthru
      _
    // Predicated region
    $region38: #{tpu_custom_call.1} parent=1 // pred_check
      _
    $region39: #{tpu_custom_call.1} parent=1 // pred_check_branch
      %66 = sbr.rel (0) target = $region41
    $region40: #{tpu_custom_call.1} parent=1 // pred_region
      %67 = dma.done [#allocation3], 256
    $region41: #{tpu_custom_call.1} parent=1 // pred_fallthru
      _
    // Predicated region
    $region42: #{tpu_custom_call.1} parent=1 // pred_check
      _
    $region43: #{tpu_custom_call.1} parent=1 // pred_check_branch
      %69 = sbr.rel (0) target = $region45
    $region44: #{tpu_custom_call.1} parent=1 // pred_region
      %70 = dma.done [#allocation6], 2048
    $region45: #{tpu_custom_call.1} parent=1 // pred_fallthru
      _
    // Predicated region
    $region46: #{tpu_custom_call.1} parent=1 // pred_check
      _
    $region47: #{tpu_custom_call.1} parent=1 // pred_check_branch
      %72 = sbr.rel (0) target = $region49
    $region48: #{tpu_custom_call.1} parent=1 // pred_region
      %73 = dma.done [#allocation6], 2048
    $region49: #{tpu_custom_call.1} parent=1 // pred_fallthru
      _
    %v74 = vld [vmem:[#allocation2] sm:$0xff]
    %v75 = vld [vmem:[#allocation2 + $0x8] sm:$0xff]
    %v76 = vld [vmem:[%s1] sm:$0x1]
    %v77 = vld [vmem:[%s2] sm:$0x1]
    %v78 = vlaneseq
    %v79 = vand.u32 %v78, 127
    %vm80 = vcmp.lt.s32.totalorder %v79, 32
    %v81 = vsel %vm80, %v74, 0.0
    %v82 = vsel %vm80, %v75, 0.0
    %83 = vadd.xlane.f32.xlu0 %v81
    %v84 = vpop.xlane.xlu0 %83
    %85 = vadd.xlane.f32.xlu0 %v82
    %v86 = vpop.xlane.xlu0 %85
    %v87 = vmul.f32 %v81, %v81
    %v88 = vmul.f32 %v82, %v82
    %89 = vadd.xlane.f32.xlu0 %v87
    %v90 = vpop.xlane.xlu0 %89
    %91 = vadd.xlane.f32.xlu0 %v88
    %v92 = vpop.xlane.xlu0 %91
    %v93 = vmul.f32 %v84, 0.03125
    %v94 = vmul.f32 %v86, 0.03125
    %v95 = vmul.f32 %v90, 0.03125
    %v96 = vmul.f32 %v92, 0.03125
    %v97 = vmul.f32 %v93, %v93
    %v98 = vmul.f32 %v94, %v94
    %v99 = vsub.f32 %v95, %v97
    %v100 = vsub.f32 %v96, %v98
    %v101 = vmax.f32 %v99, 0.0
    %v102 = vmax.f32 %v100, 0.0
    %v103 = vsub.f32 %v74, %v93
    %v104 = vsub.f32 %v75, %v94
    %v105 = vadd.f32 %v101, 1e-05
    %v106 = vadd.f32 %v102, 1e-05
    %v107 = vrsqrt.pop %v105
    %v108 = vrsqrt.pop %v106
    %v109 = vmul.f32 %v103, %v107
    %v110 = vmul.f32 %v104, %v108
    %v112 = vlaneseq
    %v113 = vshrl.u32 %v112, 7
    %v114 = vsub.s32 0, %v113
    %v115 = vrot.slane %v76, %v114
    %v117 = vmul.f32 %v109, %v115
    %v118 = vmul.f32 %v110, %v115
    %v120 = vlaneseq
    %v121 = vshrl.u32 %v120, 7
    %v122 = vsub.s32 0, %v121
    %v123 = vrot.slane %v77, %v122
    %v125 = vadd.f32 %v117, %v123
    %v126 = vadd.f32 %v118, %v123
    %v127 = vld [vmem:[#allocation5] sm:$0xff]
    %v128 = vld [vmem:[#allocation5 + $0x8] sm:$0xff]
    %v129 = vld [vmem:[#allocation5 + $0x10] sm:$0xff]
    %v130 = vld [vmem:[#allocation5 + $0x18] sm:$0xff]
    %v131 = vld [vmem:[#allocation5 + $0x20] sm:$0xff]
    %v132 = vld [vmem:[#allocation5 + $0x28] sm:$0xff]
    %v133 = vld [vmem:[#allocation5 + $0x30] sm:$0xff]
    %v134 = vld [vmem:[#allocation5 + $0x38] sm:$0xff]
    %v135 = vld [vmem:[#allocation5 + $0x40] sm:$0xff]
    %v136 = vld [vmem:[#allocation5 + $0x48] sm:$0xff]
    %v137 = vld [vmem:[#allocation5 + $0x50] sm:$0xff]
    %v138 = vld [vmem:[#allocation5 + $0x58] sm:$0xff]
    %v139 = vld [vmem:[#allocation5 + $0x60] sm:$0xff]
    %v140 = vld [vmem:[#allocation5 + $0x68] sm:$0xff]
    %v141 = vld [vmem:[#allocation5 + $0x70] sm:$0xff]
    %v142 = vld [vmem:[#allocation5 + $0x78] sm:$0xff]
    %v143 = vld [vmem:[%s4] sm:$0x1]
    %v145 = vlaneseq
    %v146 = vshrl.u32 %v145, 7
    %v147 = vsub.s32 0, %v146
    %v148 = vrot.slane %v143, %v147
    %150 = vmatprep.subr.mxu0 0.0
    %151 = vmatpush1.msra.mxu0 %v127
    %152 = vmatprep.subr.mxu0 0.0
    %153 = vmatpush1.msra.mxu0 %v128
    %154 = vmatprep.subr.mxu0 0.0
    %155 = vmatpush1.msra.mxu0 %v129
    %156 = vmatprep.subr.mxu0 0.0
    %157 = vmatpush1.msra.mxu0 %v130
    %158 = vmatprep.subr.mxu0 0.0
    %159 = vmatpush1.msra.mxu0 %v131
    %160 = vmatprep.subr.mxu0 0.0
    %161 = vmatpush1.msra.mxu0 %v132
    %162 = vmatprep.subr.mxu0 0.0
    %163 = vmatpush1.msra.mxu0 %v133
    %164 = vmatprep.subr.mxu0 0.0
    %165 = vmatpush1.msra.mxu0 %v134
    %166 = vmatprep.subr.mxu0 0.0
    %167 = vmatpush1.msra.mxu0 %v135
    %168 = vmatprep.subr.mxu0 0.0
    %169 = vmatpush1.msra.mxu0 %v136
    %170 = vmatprep.subr.mxu0 0.0
    %171 = vmatpush1.msra.mxu0 %v137
    %172 = vmatprep.subr.mxu0 0.0
    %173 = vmatpush1.msra.mxu0 %v138
    %174 = vmatprep.subr.mxu0 0.0
    %175 = vmatpush1.msra.mxu0 %v139
    %176 = vmatprep.subr.mxu0 0.0
    %177 = vmatpush1.msra.mxu0 %v140
    %178 = vmatprep.subr.mxu0 0.0
    %179 = vmatpush1.msra.mxu0 %v141
    %180 = vmatprep.subr.mxu0 0.0
    %181 = vmatpush1.msra.mxu0 %v142
    %182 = vmatprep.subr.mxu0 0.0
    %183 = vmatpush1.msra.mxu0 0.0
    %184 = vmatprep.subr.mxu0 0.0
    %185 = vmatpush1.msra.mxu0 0.0
    %186 = vmatprep.subr.mxu0 0.0
    %187 = vmatpush1.msra.mxu0 0.0
    %188 = vmatprep.subr.mxu0 0.0
    %189 = vmatpush1.msra.mxu0 0.0
    %190 = vmatprep.subr.mxu0 0.0
    %191 = vmatpush1.msra.mxu0 0.0
    %192 = vmatprep.subr.mxu0 0.0
    %193 = vmatpush1.msra.mxu0 0.0
    %194 = vmatprep.subr.mxu0 0.0
    %195 = vmatpush1.msra.mxu0 0.0
    %196 = vmatprep.subr.mxu0 0.0
    %197 = vmatpush1.msra.mxu0 0.0
    %198 = vmatprep.subr.mxu0 0.0
    %199 = vmatpush1.msra.mxu0 0.0
    %200 = vmatprep.subr.mxu0 0.0
    %201 = vmatpush1.msra.mxu0 0.0
    %202 = vmatprep.subr.mxu0 0.0
    %203 = vmatpush1.msra.mxu0 0.0
    %204 = vmatprep.subr.mxu0 0.0
    %205 = vmatpush1.msra.mxu0 0.0
    %206 = vmatprep.subr.mxu0 0.0
    %207 = vmatpush1.msra.mxu0 0.0
    %208 = vmatprep.subr.mxu0 0.0
    %209 = vmatpush1.msra.mxu0 0.0
    %210 = vmatprep.subr.mxu0 0.0
    %211 = vmatpush1.msra.mxu0 0.0
    %212 = vmatprep.subr.mxu0 0.0
    %213 = vmatpush1.msra.mxu0 0.0
    %214 = vmatprep.mubr.f32.mxu0 0.0
    %215 = vmatmul.mubr.f32.gmra.mrb[0].mxu0 %v125
    %v216 = vpop.f32.mrb[0].mxu0
    %v217 = vadd.f32 %v148, %v216
    %v218 = vpop.f32.mrb[0].mxu0
    %219 = vmatprep.mubr.f32.mxu0 0.0
    %220 = vmatmul.mubr.f32.gmra.mrb[0].mxu0 %v126
    %v221 = vpop.f32.mrb[0].mxu0
    %v222 = vadd.f32 %v148, %v221
    %v223 = vpop.f32.mrb[0].mxu0
    %224 = vdwg.mxu0
    %v225 = vmul.f32 %v217, 0.5
    %v226 = vmul.f32 %v222, 0.5
    %v227 = vmul.f32 %v217, 0.70710677
    %v228 = vmul.f32 %v222, 0.70710677
    %v229 = verf.f32.pop %v227
    %v230 = verf.f32.pop %v228
    %v231 = vadd.f32 %v229, 1.0
    %v232 = vadd.f32 %v230, 1.0
    %v233 = vmul.f32 %v225, %v231
    %v234 = vmul.f32 %v226, %v232
    %v235 = vld [vmem:[%s5] sm:$0x1]
    %v236 = vld [vmem:[%s6] sm:$0x1]
    %vm237 = vcmp.lt.s32.totalorder %v79, 64
    %v238 = vsel %vm237, %v233, 0.0
    %v239 = vsel %vm237, %v234, 0.0
    %240 = vadd.xlane.f32.xlu0 %v238
    %v241 = vpop.xlane.xlu0 %240
    %242 = vadd.xlane.f32.xlu0 %v239
    %v243 = vpop.xlane.xlu0 %242
    %v244 = vmul.f32 %v238, %v238
    %v245 = vmul.f32 %v239, %v239
    %246 = vadd.xlane.f32.xlu0 %v244
    %v247 = vpop.xlane.xlu0 %246
    %248 = vadd.xlane.f32.xlu0 %v245
    %v249 = vpop.xlane.xlu0 %248
    %v250 = vmul.f32 %v241, 0.015625
    %v251 = vmul.f32 %v243, 0.015625
    %v252 = vmul.f32 %v247, 0.015625
    %v253 = vmul.f32 %v249, 0.015625
    %v254 = vmul.f32 %v250, %v250
    %v255 = vmul.f32 %v251, %v251
    %v256 = vsub.f32 %v252, %v254
    %v257 = vsub.f32 %v253, %v255
    %v258 = vmax.f32 %v256, 0.0
    %v259 = vmax.f32 %v257, 0.0
    %v260 = vsub.f32 %v233, %v250
    %v261 = vsub.f32 %v234, %v251
    %v262 = vadd.f32 %v258, 1e-05
    %v263 = vadd.f32 %v259, 1e-05
    %v264 = vrsqrt.pop %v262
    %v265 = vrsqrt.pop %v263
    %v266 = vmul.f32 %v260, %v264
    %v267 = vmul.f32 %v261, %v265
    %v269 = vlaneseq
    %v270 = vshrl.u32 %v269, 7
    %v271 = vsub.s32 0, %v270
    %v272 = vrot.slane %v235, %v271
    %v274 = vmul.f32 %v266, %v272
    %v275 = vmul.f32 %v267, %v272
    %v277 = vlaneseq
    %v278 = vshrl.u32 %v277, 7
    %v279 = vsub.s32 0, %v278
    %v280 = vrot.slane %v236, %v279
    %v282 = vadd.f32 %v274, %v280
    %v283 = vadd.f32 %v275, %v280
    %v284 = vld [vmem:[#allocation7] sm:$0xff]
    %v285 = vld [vmem:[#allocation7 + $0x8] sm:$0xff]
    %v286 = vld [vmem:[#allocation7 + $0x10] sm:$0xff]
    %v287 = vld [vmem:[#allocation7 + $0x18] sm:$0xff]
    %v288 = vld [vmem:[#allocation7 + $0x20] sm:$0xff]
    %v289 = vld [vmem:[#allocation7 + $0x28] sm:$0xff]
    %v290 = vld [vmem:[#allocation7 + $0x30] sm:$0xff]
    %v291 = vld [vmem:[#allocation7 + $0x38] sm:$0xff]
    %v292 = vld [vmem:[#allocation7 + $0x40] sm:$0xff]
    %v293 = vld [vmem:[#allocation7 + $0x48] sm:$0xff]
    %v294 = vld [vmem:[#allocation7 + $0x50] sm:$0xff]
    %v295 = vld [vmem:[#allocation7 + $0x58] sm:$0xff]
    %v296 = vld [vmem:[#allocation7 + $0x60] sm:$0xff]
    %v297 = vld [vmem:[#allocation7 + $0x68] sm:$0xff]
    %v298 = vld [vmem:[#allocation7 + $0x70] sm:$0xff]
    %v299 = vld [vmem:[#allocation7 + $0x78] sm:$0xff]
    %v300 = vld [vmem:[%s8] sm:$0x1]
    %v302 = vlaneseq
    %v303 = vshrl.u32 %v302, 7
    %v304 = vsub.s32 0, %v303
    %v305 = vrot.slane %v300, %v304
    %307 = vmatprep.subr.mxu0 0.0
    %308 = vmatpush1.msra.mxu0 %v284
    %309 = vmatprep.subr.mxu0 0.0
    %310 = vmatpush1.msra.mxu0 %v285
    %311 = vmatprep.subr.mxu0 0.0
    %312 = vmatpush1.msra.mxu0 %v286
    %313 = vmatprep.subr.mxu0 0.0
    %314 = vmatpush1.msra.mxu0 %v287
    %315 = vmatprep.subr.mxu0 0.0
    %316 = vmatpush1.msra.mxu0 %v288
    %317 = vmatprep.subr.mxu0 0.0
    %318 = vmatpush1.msra.mxu0 %v289
    %319 = vmatprep.subr.mxu0 0.0
    %320 = vmatpush1.msra.mxu0 %v290
    %321 = vmatprep.subr.mxu0 0.0
    %322 = vmatpush1.msra.mxu0 %v291
    %323 = vmatprep.subr.mxu0 0.0
    %324 = vmatpush1.msra.mxu0 %v292
    %325 = vmatprep.subr.mxu0 0.0
    %326 = vmatpush1.msra.mxu0 %v293
    %327 = vmatprep.subr.mxu0 0.0
    %328 = vmatpush1.msra.mxu0 %v294
    %329 = vmatprep.subr.mxu0 0.0
    %330 = vmatpush1.msra.mxu0 %v295
    %331 = vmatprep.subr.mxu0 0.0
    %332 = vmatpush1.msra.mxu0 %v296
    %333 = vmatprep.subr.mxu0 0.0
    %334 = vmatpush1.msra.mxu0 %v297
    %335 = vmatprep.subr.mxu0 0.0
    %336 = vmatpush1.msra.mxu0 %v298
    %337 = vmatprep.subr.mxu0 0.0
    %338 = vmatpush1.msra.mxu0 %v299
    %339 = vmatprep.subr.mxu0 0.0
    %340 = vmatpush1.msra.mxu0 0.0
    %341 = vmatprep.subr.mxu0 0.0
    %342 = vmatpush1.msra.mxu0 0.0
    %343 = vmatprep.subr.mxu0 0.0
    %344 = vmatpush1.msra.mxu0 0.0
    %345 = vmatprep.subr.mxu0 0.0
    %346 = vmatpush1.msra.mxu0 0.0
    %347 = vmatprep.subr.mxu0 0.0
    %348 = vmatpush1.msra.mxu0 0.0
    %349 = vmatprep.subr.mxu0 0.0
    %350 = vmatpush1.msra.mxu0 0.0
    %351 = vmatprep.subr.mxu0 0.0
    %352 = vmatpush1.msra.mxu0 0.0
    %353 = vmatprep.subr.mxu0 0.0
    %354 = vmatpush1.msra.mxu0 0.0
    %355 = vmatprep.subr.mxu0 0.0
    %356 = vmatpush1.msra.mxu0 0.0
    %357 = vmatprep.subr.mxu0 0.0
    %358 = vmatpush1.msra.mxu0 0.0
    %359 = vmatprep.subr.mxu0 0.0
    %360 = vmatpush1.msra.mxu0 0.0
    %361 = vmatprep.subr.mxu0 0.0
    %362 = vmatpush1.msra.mxu0 0.0
    %363 = vmatprep.subr.mxu0 0.0
    %364 = vmatpush1.msra.mxu0 0.0
    %365 = vmatprep.subr.mxu0 0.0
    %366 = vmatpush1.msra.mxu0 0.0
    %367 = vmatprep.subr.mxu0 0.0
    %368 = vmatpush1.msra.mxu0 0.0
    %369 = vmatprep.subr.mxu0 0.0
    %370 = vmatpush1.msra.mxu0 0.0
    %371 = vmatprep.mubr.f32.mxu0 0.0
    %372 = vmatmul.mubr.f32.gmra.mrb[0].mxu0 %v282
    %v373 = vpop.f32.mrb[0].mxu0
    %v374 = vadd.f32 %v305, %v373
    %v375 = vpop.f32.mrb[0].mxu0
    %376 = vmatprep.mubr.f32.mxu0 0.0
    %377 = vmatmul.mubr.f32.gmra.mrb[0].mxu0 %v283
    %v378 = vpop.f32.mrb[0].mxu0
    %v379 = vadd.f32 %v305, %v378
    %v380 = vpop.f32.mrb[0].mxu0
    %381 = vdwg.mxu0
    %v382 = vadd.f32 %v74, %v374
    %v383 = vadd.f32 %v75, %v379
    %384 = vst [vmem:[#allocation8] sm:$0xff] %v382
    %385 = vst [vmem:[#allocation8 + $0x8] sm:$0xff] %v383
    // Predicated region
    $region50: #{tpu_custom_call.1} parent=1 // pred_check
      _
    $region51: #{tpu_custom_call.1} parent=1 // pred_check_branch
      %387 = sbr.rel (0) target = $region53
    $region52: #{tpu_custom_call.1} parent=1 // pred_region
      %s389 = ssub.s32 256, 256
      %390 = vsyncadd [#allocation4], %s389
      %s391 = sshll.u32 [#allocation8], 4
      %s392 = int_to_ptr.vmem [resolvable:$true] %s391
      %397 = dma.vmem_to_hbm [thread:$0]  %s392, 256, %s9, [#allocation4], 128, 128, 8
    $region53: #{tpu_custom_call.1} parent=1 // pred_fallthru
      _
    // Predicated region
    $region54: #{tpu_custom_call.1} parent=1 // pred_check
      _
    $region55: #{tpu_custom_call.1} parent=1 // pred_check_branch
      %399 = sbr.rel (0) target = $region57
    $region56: #{tpu_custom_call.1} parent=1 // pred_region
      %400 = dma.done [#allocation4], 256
    $region57: #{tpu_custom_call.1} parent=1 // pred_fallthru
      _
    %401 = vsyncpa [#allocation3], 1
    %402 = vsyncpa [#allocation6], 1
    %403 = vsyncpa [#allocation4], 1

</llo_original>
